<compile_context>
chip_gen: v7x
topology: tpu7x:2x2x1
jax: 0.10.0
libtpu: 0.0.40
codegen_flags: <defaults>
</compile_context>

<pallas_src>
import math
import warnings

import jax
import jax.numpy as jnp
from jax import lax
from jax.experimental import pallas as pl
from jax.experimental.pallas import tpu as pltpu

INP = 8
OUP = 8
STRIDE = 1                                 # actual_stride (omit_stride=False)
EXPAND_RATIO = 2
HID = round(INP * EXPAND_RATIO)            # 16
USE_RES = (STRIDE == 1) and (INP == OUP)   # no_res_connect=False
BN_EPS = 1e-5
LANE = 128

# Layout of the packed constant operand (PACK_ROWS, 128) float32:
#   cols [COL_W1, COL_W1+INP)  rows [0,HID) : BN-folded 1x1 expand weights (HID, INP)
#   cols [COL_DW, COL_DW+9)    rows [0,HID) : BN-folded 3x3 dw taps, tap k = 3*di+dj
#   cols [COL_W3, COL_W3+HID)  rows [0,OUP) : BN-folded 1x1 project weights (OUP, HID)
#   col  COL_B1 / COL_B2 / COL_B3           : folded BN biases b1 / b2 / b3
COL_W1 = 0
COL_DW = COL_W1 + INP
COL_W3 = COL_DW + 9
COL_B1 = COL_W3 + HID
COL_B2 = COL_B1 + 1
COL_B3 = COL_B2 + 1
PACK_ROWS = max(HID, OUP, 8)
PACK_COLS = 128
assert COL_B3 + 1 <= PACK_COLS


# ---------------------------------------------------------------------------
# pltpu.roll direction probe (run once, eagerly, cached).
# Guarantees the depthwise-conv shifts are correct regardless of the rotate
# convention; falls back LOUDLY to jnp.roll (slice+concat) if pltpu.roll won't
# lower.  mode: +1 = jnp.roll convention, -1 = opposite, 0 = fallback.
# ---------------------------------------------------------------------------
_ROLL_MODE = None


def _get_roll_mode(hw):
    global _ROLL_MODE
    if _ROLL_MODE is not None:
        return _ROLL_MODE
    try:
        def probe_kernel(x_ref, o_ref):
            o_ref[...] = pltpu.roll(x_ref[...], 1, 1)

        x = lax.broadcasted_iota(jnp.float32, (8, hw), 1)
        out = pl.pallas_call(
            probe_kernel,
            out_shape=jax.ShapeDtypeStruct((8, hw), jnp.float32),
        )(x)
        v = float(jax.device_get(out[0, 0]))
        if v == float(hw - 1):
            _ROLL_MODE = 1          # matches jnp.roll: out[i] = x[(i - s) % n]
        elif v == 1.0:
            _ROLL_MODE = -1         # opposite rotation direction
        else:
            _ROLL_MODE = 0
    except Exception:               # lowering not supported -> safe fallback
        _ROLL_MODE = 0
    if _ROLL_MODE == 0:
        warnings.warn("pltpu.roll unavailable or unrecognized convention; "
                      "falling back to jnp.roll (correct but slower depthwise "
                      "path).")
    return _ROLL_MODE


# ---------------------------------------------------------------------------
# Host-side precomputation: edge masks and packed (BN-folded) parameters.
# ---------------------------------------------------------------------------
def _make_tap_masks(H, W, hw_pad):
    """(8, hw_pad) f32 mask per non-center 3x3 tap (order di-major, skip center).

    Zeroes out contributions that would read across the image boundary (i.e.
    the implicit zero padding of the depthwise conv).  Padded lanes past H*W
    never leak into valid outputs because every cross-boundary read is masked.
    """
    pos = jnp.arange(hw_pad, dtype=jnp.int32)
    row = pos // W
    col = pos % W
    valid = pos < (H * W)
    rows = []
    for di in range(3):
        for dj in range(3):
            if di == 1 and dj == 1:
                continue
            m = valid
            if di == 0:
                m = m & (row >= 1)
            if di == 2:
                m = m & (row <= H - 2)
            if dj == 0:
                m = m & (col >= 1)
            if dj == 2:
                m = m & (col <= W - 2)
            rows.append(m)
    return jnp.stack(rows).astype(jnp.float32)


def _pack_params(params):
    w1, dw, w3, s1, b1, s2, b2, s3, b3 = params
    w1e = w1 * s1[:, None]                       # fold BN scale into weights
    dwe = dw.reshape(HID, 9) * s2[:, None]
    w3e = w3 * s3[:, None]
    c = jnp.zeros((PACK_ROWS, PACK_COLS), jnp.float32)
    c = c.at[:HID, COL_W1:COL_W1 + INP].set(w1e)
    c = c.at[:HID, COL_DW:COL_DW + 9].set(dwe)
    c = c.at[:OUP, COL_W3:COL_W3 + HID].set(w3e)
    c = c.at[:HID, COL_B1].set(b1)
    c = c.at[:HID, COL_B2].set(b2)
    c = c.at[:OUP, COL_B3].set(b3)
    return c


# ---------------------------------------------------------------------------
# Kernel
# ---------------------------------------------------------------------------
def _make_kernel(W, hw_pad, bb, roll_mode):
    # Flat input offsets for the 8 non-center taps (same order as the masks).
    tap_offsets = []
    for di in range(3):
        for dj in range(3):
            if di == 1 and dj == 1:
                continue
            tap_offsets.append((3 * di + dj, (di - 1) * W + (dj - 1)))

    def kernel(x_ref, c_ref, m_ref, o_ref):
        cst = c_ref[...]                                 # (PACK_ROWS, 128)

        # --- hoisted once per grid step (shared by all BB images) ----------
        w1 = cst[:HID, COL_W1:COL_W1 + INP]              # (HID, INP)
        w3 = cst[:OUP, COL_W3:COL_W3 + HID]              # (OUP, HID)
        b1 = jnp.broadcast_to(cst[:HID, COL_B1:COL_B1 + 1], (HID, hw_pad))
        b2 = jnp.broadcast_to(cst[:HID, COL_B2:COL_B2 + 1], (HID, hw_pad))
        b3 = jnp.broadcast_to(cst[:OUP, COL_B3:COL_B3 + 1], (OUP, hw_pad))
        dw_center = jnp.broadcast_to(cst[:HID, COL_DW + 4:COL_DW + 5],
                                     (HID, hw_pad))
        taps = []                                        # (offset, mask*tap)
        for r, (k, off) in enumerate(tap_offsets):
            tap = cst[:HID, COL_DW + k:COL_DW + k + 1]   # (HID, 1)
            mask = m_ref[r:r + 1, :]                     # (1, hw_pad)
            taps.append((off, tap * mask))               # (HID, hw_pad)

        # --- per-image body --------------------------------------------------
        def one_image(b):
            x = x_ref[b]                                 # (INP, hw_pad)

            # 1x1 expand conv (+ folded BN) + ReLU6 : MXU
            h = jnp.dot(w1, x, preferred_element_type=jnp.float32)
            h = jnp.clip(h + b1, 0.0, 6.0)               # (HID, hw_pad)

            # 3x3 depthwise conv (pad=1, stride=1) : lane rolls (XLU) + masks
            acc = h * dw_center
            for off, mt in taps:
                if roll_mode == 0:
                    sh = jnp.roll(h, -off, axis=1)
                else:
                    shift = (-off) % hw_pad if roll_mode == 1 else off % hw_pad
                    sh = pltpu.roll(h, shift, 1)
                acc = acc + sh * mt
            g = jnp.clip(acc + b2, 0.0, 6.0)             # (HID, hw_pad)

            # 1x1 project conv (+ folded BN) : MXU
            y = jnp.dot(w3, g, preferred_element_type=jnp.float32) + b3
            if USE_RES:
                y = y + x
            o_ref[b] = y                                 # lane-dense store

        if bb == 1:
            one_image(0)
        else:
            def body(b, carry):
                one_image(b)
                return carry
            lax.fori_loop(0, bb, body, 0, unroll=min(4, bb))

    return kernel


# ---------------------------------------------------------------------------
# Wrapper
# ---------------------------------------------------------------------------
def _choose_block_batch(n, in_bytes_per_image):
    # Target ~2 MiB input blocks: with the output block and double buffering
    # that is ~8 MiB of VMEM, safely under the 16/32 MiB default scoped limits
    # on v5e/v6e/v7x.
    cap = max(1, (2 * 1024 * 1024) // max(in_bytes_per_image, 1))
    bb = min(n, cap)
    # Keep >= 2 grid steps whenever possible so a v7x megacore has work for
    # both TensorCores (dimension_semantics=("parallel",)).
    if n >= 2:
        bb = min(bb, (n + 1) // 2)
    return max(1, bb)


def inverted_residual_pallas(x_nchw, params):
    """x_nchw: (N, INP, H, W) float32 -> (N, OUP, H, W) float32."""
    N, C, H, W = x_nchw.shape
    assert C == INP and STRIDE == 1
    hw = H * W
    hw_pad = max(LANE, ((hw + LANE - 1) // LANE) * LANE)

    # channels-on-sublanes / spatial-on-lanes layout; free reshape, no transpose
    x = x_nchw.reshape(N, C, hw).astype(jnp.float32)
    if hw_pad != hw:
        x = jnp.pad(x, ((0, 0), (0, 0), (0, hw_pad - hw)))

    bb = _choose_block_batch(N, C * hw_pad * 4)
    n_pad = ((N + bb - 1) // bb) * bb
    if n_pad != N:
        x = jnp.pad(x, ((0, n_pad - N), (0, 0), (0, 0)))

    packed = _pack_params(params)
    masks = _make_tap_masks(H, W, hw_pad)
    kernel = _make_kernel(W, hw_pad, bb, _get_roll_mode(hw_pad))

    out = pl.pallas_call(
        kernel,
        out_shape=jax.ShapeDtypeStruct((n_pad, OUP, hw_pad), jnp.float32),
        grid=(n_pad // bb,),
        in_specs=[
            pl.BlockSpec((bb, C, hw_pad), lambda n: (n, 0, 0)),            # x
            pl.BlockSpec((PACK_ROWS, PACK_COLS), lambda n: (0, 0)),        # weights
            pl.BlockSpec((8, hw_pad), lambda n: (0, 0)),                   # masks
        ],
        out_specs=pl.BlockSpec((bb, OUP, hw_pad), lambda n: (n, 0, 0)),
        compiler_params=pltpu.CompilerParams(
            dimension_semantics=("parallel",)),
    )(x, packed, masks)

    return out[:N, :, :hw].reshape(N, OUP, H, W)


# ---------------------------------------------------------------------------
# Parameter init (mirrors the module's _initialize_weights) and reference
# ---------------------------------------------------------------------------
def init_params(key):
    k1, k2, k3 = jax.random.split(key, 3)

    std1 = math.sqrt(2.0 / (1 * 1 * HID))
    w1 = std1 * jax.random.normal(k1, (HID, INP), jnp.float32)     # (out, in)
    stdd = math.sqrt(2.0 / (3 * 3 * HID))
    dw = stdd * jax.random.normal(k2, (HID, 3, 3), jnp.float32)    # (out, kh, kw)
    std3 = math.sqrt(2.0 / (1 * 1 * OUP))
    w3 = std3 * jax.random.normal(k3, (OUP, HID), jnp.float32)     # (out, in)

    # Eval-mode BN fold (gamma=1, beta=0, running_mean=0, running_var=1).
    def bn_fold(n):
        gamma = jnp.ones((n,), jnp.float32)
        beta = jnp.zeros((n,), jnp.float32)
        mean = jnp.zeros((n,), jnp.float32)
        var = jnp.ones((n,), jnp.float32)
        scale = gamma / jnp.sqrt(var + BN_EPS)
        bias = beta - mean * scale
        return scale, bias

    s1, b1 = bn_fold(HID)
    s2, b2 = bn_fold(HID)
    s3, b3 = bn_fold(OUP)
    return (w1, dw, w3, s1, b1, s2, b2, s3, b3)


def ref_forward(x_nchw, params):
    """Pure-JAX reference in exact f32 (precision=HIGHEST), PyTorch eval semantics."""
    w1, dw, w3, s1, b1, s2, b2, s3, b3 = params
    N, C, H, W = x_nchw.shape
    x = x_nchw.astype(jnp.float32)

    h = jnp.einsum('nchw,dc->ndhw', x, w1, precision=lax.Precision.HIGHEST)
    h = jnp.clip(h * s1[None, :, None, None] + b1[None, :, None, None], 0.0, 6.0)

    hp = jnp.pad(h, ((0, 0), (0, 0), (1, 1), (1, 1)))
    g = jnp.zeros_like(h)
    for di in range(3):
        for dj in range(3):
            g = g + hp[:, :, di:di + H, dj:dj + W] * dw[:, di, dj].reshape(1, HID, 1, 1)
    g = jnp.clip(g * s2[None, :, None, None] + b2[None, :, None, None], 0.0, 6.0)

    y = jnp.einsum('ndhw,od->nohw', g, w3, precision=lax.Precision.HIGHEST)
    y = y * s3[None, :, None, None] + b3[None, :, None, None]
    return x + y if USE_RES else y


if __name__ == "__main__":
    key = jax.random.PRNGKey(0)
    kx1, kx2, kp = jax.random.split(key, 3)
    params = init_params(kp)

    # Case 1: batch 2 -> BB=1, grid=(2,)  (per-image path; 2 parallel steps).
    x1 = jax.random.normal(kx1, (2, INP, 16, 16), jnp.float32)
    out1 = jax.block_until_ready(inverted_residual_pallas(x1, params))
    ref1 = ref_forward(x1, params)
    assert out1.shape == (2, OUP, 16, 16), out1.shape
    err1 = float(jnp.max(jnp.abs(out1 - ref1)))

    # Case 2: batch 6 -> BB=3, grid=(2,)  (exercises the batched fori_loop path).
    x2 = jax.random.normal(kx2, (6, INP, 16, 16), jnp.float32)
    out2 = jax.block_until_ready(inverted_residual_pallas(x2, params))
    ref2 = ref_forward(x2, params)
    assert out2.shape == (6, OUP, 16, 16), out2.shape
    err2 = float(jnp.max(jnp.abs(out2 - ref2)))

    # MXU f32 matmuls may be computed via bf16 multi-pass; 5e-2 is loose enough
    # for any such precision mode while still catching indexing / mask /
    # residual bugs (those produce O(0.1..1) errors).
    if not (err1 < 5e-2 and err2 < 5e-2):
        raise AssertionError(f"Pallas output mismatch: err1={err1}, err2={err2}")

    print("KERNEL_OK")
</pallas_src>

<mosaic_0001>
module attributes {stable_mosaic.version = 11 : i64} {
  func.func @probe_kernel(%arg0: memref<8x256xf32, #tpu.memory_space<vmem>>, %arg1: memref<8x256xf32, #tpu.memory_space<vmem>>) attributes {dimension_semantics = [], scalar_prefetch = 0 : i64, scratch_operands = 0 : i64, tpu.core_type = #tpu.core_type<tc>} {
    %c0 = arith.constant 0 : index
    %c0_0 = arith.constant 0 : index
    %0 = vector.load %arg0[%c0, %c0_0] : memref<8x256xf32, #tpu.memory_space<vmem>>, vector<8x256xf32>
    %c1_i32 = arith.constant 1 : i32
    %1 = tpu.dynamic_rotate %0 by %c1_i32 dim 1 : vector<8x256xf32>, i32 -> vector<8x256xf32>
    %c0_1 = arith.constant 0 : index
    %c0_2 = arith.constant 0 : index
    %2 = vector.load %arg1[%c0_1, %c0_2] : memref<8x256xf32, #tpu.memory_space<vmem>>, vector<8x256xf32>
    tpu.vector_store %arg1[%c0_1, %c0_2], %1 {strides = array<i32>} : memref<8x256xf32, #tpu.memory_space<vmem>>, vector<8x256xf32>,
    return
  }
}

module attributes {stable_mosaic.version = 11 : i64} {
  func.func @kernel(%arg0: i32, %arg1: memref<1x8x256xf32, #tpu.memory_space<vmem>>, %arg2: memref<16x128xf32, #tpu.memory_space<vmem>>, %arg3: memref<8x256xf32, #tpu.memory_space<vmem>>, %arg4: memref<1x8x256xf32, #tpu.memory_space<vmem>>) attributes {dimension_semantics = [#tpu.dimension_semantics<parallel>], iteration_bounds = array<i64: 2>, scalar_prefetch = 0 : i64, scratch_operands = 0 : i64, tpu.core_type = #tpu.core_type<tc>, window_params = [{transform_indices = @transform_0, window_bounds = array<i64: 1, 8, 256>}, {pipeline_mode = #tpu.pipeline_mode<synchronous>, transform_indices = @transform_1, window_bounds = array<i64: 16, 128>}, {pipeline_mode = #tpu.pipeline_mode<synchronous>, transform_indices = @transform_2, window_bounds = array<i64: 8, 256>}, {transform_indices = @transform_3, window_bounds = array<i64: 1, 8, 256>}]} {
    %c0 = arith.constant 0 : index
    %c0_0 = arith.constant 0 : index
    %0 = vector.load %arg2[%c0, %c0_0] : memref<16x128xf32, #tpu.memory_space<vmem>>, vector<16x128xf32>
    %1 = vector.extract_strided_slice %0 {offsets = [0, 0], sizes = [16, 8], strides = [1, 1]} : vector<16x128xf32> to vector<16x8xf32>
    %2 = vector.extract_strided_slice %0 {offsets = [0, 17], sizes = [8, 16], strides = [1, 1]} : vector<16x128xf32> to vector<8x16xf32>
    %3 = vector.extract_strided_slice %0 {offsets = [0, 33], sizes = [16, 1], strides = [1, 1]} : vector<16x128xf32> to vector<16x1xf32>
    %4 = vector.shape_cast %3 : vector<16x1xf32> to vector<16x1xf32>
    %5 = vector.broadcast %4 : vector<16x1xf32> to vector<16x256xf32>
    %6 = vector.extract_strided_slice %0 {offsets = [0, 34], sizes = [16, 1], strides = [1, 1]} : vector<16x128xf32> to vector<16x1xf32>
    %7 = vector.shape_cast %6 : vector<16x1xf32> to vector<16x1xf32>
    %8 = vector.broadcast %7 : vector<16x1xf32> to vector<16x256xf32>
    %9 = vector.extract_strided_slice %0 {offsets = [0, 35], sizes = [8, 1], strides = [1, 1]} : vector<16x128xf32> to vector<8x1xf32>
    %10 = vector.shape_cast %9 : vector<8x1xf32> to vector<8x1xf32>
    %11 = vector.broadcast %10 : vector<8x1xf32> to vector<8x256xf32>
    %12 = vector.extract_strided_slice %0 {offsets = [0, 12], sizes = [16, 1], strides = [1, 1]} : vector<16x128xf32> to vector<16x1xf32>
    %13 = vector.shape_cast %12 : vector<16x1xf32> to vector<16x1xf32>
    %14 = vector.broadcast %13 : vector<16x1xf32> to vector<16x256xf32>
    %15 = vector.extract_strided_slice %0 {offsets = [0, 8], sizes = [16, 1], strides = [1, 1]} : vector<16x128xf32> to vector<16x1xf32>
    %c0_1 = arith.constant 0 : index
    %c0_2 = arith.constant 0 : index
    %16 = vector.load %arg3[%c0_1, %c0_2] : memref<8x256xf32, #tpu.memory_space<vmem>>, vector<1x256xf32>
    %17 = vector.broadcast %15 : vector<16x1xf32> to vector<16x256xf32>
    %18 = vector.broadcast %16 : vector<1x256xf32> to vector<16x256xf32>
    %19 = arith.mulf %17, %18 : vector<16x256xf32>
    %20 = vector.extract_strided_slice %0 {offsets = [0, 9], sizes = [16, 1], strides = [1, 1]} : vector<16x128xf32> to vector<16x1xf32>
    %c1 = arith.constant 1 : index
    %c0_3 = arith.constant 0 : index
    %21 = vector.load %arg3[%c1, %c0_3] : memref<8x256xf32, #tpu.memory_space<vmem>>, vector<1x256xf32>
    %22 = vector.broadcast %20 : vector<16x1xf32> to vector<16x256xf32>
    %23 = vector.broadcast %21 : vector<1x256xf32> to vector<16x256xf32>
    %24 = arith.mulf %22, %23 : vector<16x256xf32>
    %25 = vector.extract_strided_slice %0 {offsets = [0, 10], sizes = [16, 1], strides = [1, 1]} : vector<16x128xf32> to vector<16x1xf32>
    %c2 = arith.constant 2 : index
    %c0_4 = arith.constant 0 : index
    %26 = vector.load %arg3[%c2, %c0_4] : memref<8x256xf32, #tpu.memory_space<vmem>>, vector<1x256xf32>
    %27 = vector.broadcast %25 : vector<16x1xf32> to vector<16x256xf32>
    %28 = vector.broadcast %26 : vector<1x256xf32> to vector<16x256xf32>
    %29 = arith.mulf %27, %28 : vector<16x256xf32>
    %30 = vector.extract_strided_slice %0 {offsets = [0, 11], sizes = [16, 1], strides = [1, 1]} : vector<16x128xf32> to vector<16x1xf32>
    %c3 = arith.constant 3 : index
    %c0_5 = arith.constant 0 : index
    %31 = vector.load %arg3[%c3, %c0_5] : memref<8x256xf32, #tpu.memory_space<vmem>>, vector<1x256xf32>
    %32 = vector.broadcast %30 : vector<16x1xf32> to vector<16x256xf32>
    %33 = vector.broadcast %31 : vector<1x256xf32> to vector<16x256xf32>
    %34 = arith.mulf %32, %33 : vector<16x256xf32>
    %35 = vector.extract_strided_slice %0 {offsets = [0, 13], sizes = [16, 1], strides = [1, 1]} : vector<16x128xf32> to vector<16x1xf32>
    %c4 = arith.constant 4 : index
    %c0_6 = arith.constant 0 : index
    %36 = vector.load %arg3[%c4, %c0_6] : memref<8x256xf32, #tpu.memory_space<vmem>>, vector<1x256xf32>
    %37 = vector.broadcast %35 : vector<16x1xf32> to vector<16x256xf32>
    %38 = vector.broadcast %36 : vector<1x256xf32> to vector<16x256xf32>
    %39 = arith.mulf %37, %38 : vector<16x256xf32>
    %40 = vector.extract_strided_slice %0 {offsets = [0, 14], sizes = [16, 1], strides = [1, 1]} : vector<16x128xf32> to vector<16x1xf32>
    %c5 = arith.constant 5 : index
    %c0_7 = arith.constant 0 : index
    %41 = vector.load %arg3[%c5, %c0_7] : memref<8x256xf32, #tpu.memory_space<vmem>>, vector<1x256xf32>
    %42 = vector.broadcast %40 : vector<16x1xf32> to vector<16x256xf32>
    %43 = vector.broadcast %41 : vector<1x256xf32> to vector<16x256xf32>
    %44 = arith.mulf %42, %43 : vector<16x256xf32>
    %45 = vector.extract_strided_slice %0 {offsets = [0, 15], sizes = [16, 1], strides = [1, 1]} : vector<16x128xf32> to vector<16x1xf32>
    %c6 = arith.constant 6 : index
    %c0_8 = arith.constant 0 : index
    %46 = vector.load %arg3[%c6, %c0_8] : memref<8x256xf32, #tpu.memory_space<vmem>>, vector<1x256xf32>
    %47 = vector.broadcast %45 : vector<16x1xf32> to vector<16x256xf32>
    %48 = vector.broadcast %46 : vector<1x256xf32> to vector<16x256xf32>
    %49 = arith.mulf %47, %48 : vector<16x256xf32>
    %50 = vector.extract_strided_slice %0 {offsets = [0, 16], sizes = [16, 1], strides = [1, 1]} : vector<16x128xf32> to vector<16x1xf32>
    %c7 = arith.constant 7 : index
    %c0_9 = arith.constant 0 : index
    %51 = vector.load %arg3[%c7, %c0_9] : memref<8x256xf32, #tpu.memory_space<vmem>>, vector<1x256xf32>
    %52 = vector.broadcast %50 : vector<16x1xf32> to vector<16x256xf32>
    %53 = vector.broadcast %51 : vector<1x256xf32> to vector<16x256xf32>
    %54 = arith.mulf %52, %53 : vector<16x256xf32>
    %c0_10 = arith.constant 0 : index
    %c0_11 = arith.constant 0 : index
    %c0_12 = arith.constant 0 : index
    %55 = vector.load %arg1[%c0_10, %c0_11, %c0_12] : memref<1x8x256xf32, #tpu.memory_space<vmem>>, vector<1x8x256xf32>
    %56 = vector.shape_cast %55 : vector<1x8x256xf32> to vector<8x256xf32>
    %cst = arith.constant dense<0.000000e+00> : vector<16x256xf32>
    %57 = tpu.matmul %1, %56, %cst {dimension_numbers = #tpu.dot_dimension_numbers<[1], [0], [0], [1], [0, 0, 1, 1], [], []>} : vector<16x8xf32>, vector<8x256xf32>, vector<16x256xf32> -> vector<16x256xf32>
    %58 = arith.addf %57, %5 : vector<16x256xf32>
    %cst_13 = arith.constant 0.000000e+00 : f32
    %cst_14 = arith.constant 6.000000e+00 : f32
    %59 = vector.broadcast %cst_13 : f32 to vector<16x256xf32>
    %60 = arith.maximumf %59, %58 : vector<16x256xf32>
    %61 = vector.broadcast %cst_14 : f32 to vector<16x256xf32>
    %62 = arith.minimumf %61, %60 : vector<16x256xf32>
    %63 = arith.mulf %62, %14 : vector<16x256xf32>
    %64 = vector.extract_strided_slice %62 {offsets = [0, 239], sizes = [16, 17], strides = [1, 1]} : vector<16x256xf32> to vector<16x17xf32>
    %65 = vector.extract_strided_slice %62 {offsets = [0, 0], sizes = [16, 239], strides = [1, 1]} : vector<16x256xf32> to vector<16x239xf32>
    %66 = tpu.concatenate %64, %65 in 1 : vector<16x17xf32>, vector<16x239xf32> -> vector<16x256xf32>
    %67 = arith.mulf %66, %19 : vector<16x256xf32>
    %68 = arith.addf %63, %67 : vector<16x256xf32>
    %69 = vector.extract_strided_slice %62 {offsets = [0, 240], sizes = [16, 16], strides = [1, 1]} : vector<16x256xf32> to vector<16x16xf32>
    %70 = vector.extract_strided_slice %62 {offsets = [0, 0], sizes = [16, 240], strides = [1, 1]} : vector<16x256xf32> to vector<16x240xf32>
    %71 = tpu.concatenate %69, %70 in 1 : vector<16x16xf32>, vector<16x240xf32> -> vector<16x256xf32>
    %72 = arith.mulf %71, %24 : vector<16x256xf32>
    %73 = arith.addf %68, %72 : vector<16x256xf32>
    %74 = vector.extract_strided_slice %62 {offsets = [0, 241], sizes = [16, 15], strides = [1, 1]} : vector<16x256xf32> to vector<16x15xf32>
    %75 = vector.extract_strided_slice %62 {offsets = [0, 0], sizes = [16, 241], strides = [1, 1]} : vector<16x256xf32> to vector<16x241xf32>
    %76 = tpu.concatenate %74, %75 in 1 : vector<16x15xf32>, vector<16x241xf32> -> vector<16x256xf32>
    %77 = arith.mulf %76, %29 : vector<16x256xf32>
    %78 = arith.addf %73, %77 : vector<16x256xf32>
    %79 = vector.extract_strided_slice %62 {offsets = [0, 255], sizes = [16, 1], strides = [1, 1]} : vector<16x256xf32> to vector<16x1xf32>
    %80 = vector.extract_strided_slice %62 {offsets = [0, 0], sizes = [16, 255], strides = [1, 1]} : vector<16x256xf32> to vector<16x255xf32>
    %81 = tpu.concatenate %79, %80 in 1 : vector<16x1xf32>, vector<16x255xf32> -> vector<16x256xf32>
    %82 = arith.mulf %81, %34 : vector<16x256xf32>
    %83 = arith.addf %78, %82 : vector<16x256xf32>
    %84 = vector.extract_strided_slice %62 {offsets = [0, 1], sizes = [16, 255], strides = [1, 1]} : vector<16x256xf32> to vector<16x255xf32>
    %85 = vector.extract_strided_slice %62 {offsets = [0, 0], sizes = [16, 1], strides = [1, 1]} : vector<16x256xf32> to vector<16x1xf32>
    %86 = tpu.concatenate %84, %85 in 1 : vector<16x255xf32>, vector<16x1xf32> -> vector<16x256xf32>
    %87 = arith.mulf %86, %39 : vector<16x256xf32>
    %88 = arith.addf %83, %87 : vector<16x256xf32>
    %89 = vector.extract_strided_slice %62 {offsets = [0, 15], sizes = [16, 241], strides = [1, 1]} : vector<16x256xf32> to vector<16x241xf32>
    %90 = vector.extract_strided_slice %62 {offsets = [0, 0], sizes = [16, 15], strides = [1, 1]} : vector<16x256xf32> to vector<16x15xf32>
    %91 = tpu.concatenate %89, %90 in 1 : vector<16x241xf32>, vector<16x15xf32> -> vector<16x256xf32>
    %92 = arith.mulf %91, %44 : vector<16x256xf32>
    %93 = arith.addf %88, %92 : vector<16x256xf32>
    %94 = vector.extract_strided_slice %62 {offsets = [0, 16], sizes = [16, 240], strides = [1, 1]} : vector<16x256xf32> to vector<16x240xf32>
    %95 = vector.extract_strided_slice %62 {offsets = [0, 0], sizes = [16, 16], strides = [1, 1]} : vector<16x256xf32> to vector<16x16xf32>
    %96 = tpu.concatenate %94, %95 in 1 : vector<16x240xf32>, vector<16x16xf32> -> vector<16x256xf32>
    %97 = arith.mulf %96, %49 : vector<16x256xf32>
    %98 = arith.addf %93, %97 : vector<16x256xf32>
    %99 = vector.extract_strided_slice %62 {offsets = [0, 17], sizes = [16, 239], strides = [1, 1]} : vector<16x256xf32> to vector<16x239xf32>
    %100 = vector.extract_strided_slice %62 {offsets = [0, 0], sizes = [16, 17], strides = [1, 1]} : vector<16x256xf32> to vector<16x17xf32>
    %101 = tpu.concatenate %99, %100 in 1 : vector<16x239xf32>, vector<16x17xf32> -> vector<16x256xf32>
    %102 = arith.mulf %101, %54 : vector<16x256xf32>
    %103 = arith.addf %98, %102 : vector<16x256xf32>
    %104 = arith.addf %103, %8 : vector<16x256xf32>
    %cst_15 = arith.constant 0.000000e+00 : f32
    %cst_16 = arith.constant 6.000000e+00 : f32
    %105 = vector.broadcast %cst_15 : f32 to vector<16x256xf32>
    %106 = arith.maximumf %105, %104 : vector<16x256xf32>
    %107 = vector.broadcast %cst_16 : f32 to vector<16x256xf32>
    %108 = arith.minimumf %107, %106 : vector<16x256xf32>
    %cst_17 = arith.constant dense<0.000000e+00> : vector<8x256xf32>
    %109 = tpu.matmul %2, %108, %cst_17 {dimension_numbers = #tpu.dot_dimension_numbers<[1], [0], [0], [1], [0, 0, 1, 1], [], []>} : vector<8x16xf32>, vector<16x256xf32>, vector<8x256xf32> -> vector<8x256xf32>
    %110 = arith.addf %109, %11 : vector<8x256xf32>
    %111 = arith.addf %110, %56 : vector<8x256xf32>
    %c0_18 = arith.constant 0 : index
    %c0_19 = arith.constant 0 : index
    %c0_20 = arith.constant 0 : index
    %112 = vector.load %arg4[%c0_18, %c0_19, %c0_20] : memref<1x8x256xf32, #tpu.memory_space<vmem>>, vector<1x8x256xf32>
    %113 = vector.shape_cast %112 : vector<1x8x256xf32> to vector<8x256xf32>
    %114 = vector.shape_cast %111 : vector<8x256xf32> to vector<1x8x256xf32>
    tpu.vector_store %arg4[%c0_18, %c0_19, %c0_20], %114 {strides = array<i32>} : memref<1x8x256xf32, #tpu.memory_space<vmem>>, vector<1x8x256xf32>,
    return
  }
  func.func @transform_0(%arg0: i32) -> (i32, i32, i32) {
    %c0_i32 = arith.constant 0 : i32
    %c0_i32_0 = arith.constant 0 : i32
    %c0_i32_1 = arith.constant 0 : i32
    return %arg0, %c0_i32, %c0_i32_0 : i32, i32, i32
  }
  func.func @transform_1(%arg0: i32) -> (i32, i32) {
    %c0_i32 = arith.constant 0 : i32
    %c0_i32_0 = arith.constant 0 : i32
    %c0_i32_1 = arith.constant 0 : i32
    return %c0_i32, %c0_i32_0 : i32, i32
  }
  func.func @transform_2(%arg0: i32) -> (i32, i32) {
    %c0_i32 = arith.constant 0 : i32
    %c0_i32_0 = arith.constant 0 : i32
    %c0_i32_1 = arith.constant 0 : i32
    return %c0_i32, %c0_i32_0 : i32, i32
  }
  func.func @transform_3(%arg0: i32) -> (i32, i32, i32) {
    %c0_i32 = arith.constant 0 : i32
    %c0_i32_0 = arith.constant 0 : i32
    %c0_i32_1 = arith.constant 0 : i32
    return %arg0, %c0_i32, %c0_i32_0 : i32, i32, i32
  }
}

</mosaic_0001>

<llo_original>
// kernel: tpu_custom_call.1
$region0: #{tpu_custom_call.1}
  #allocation0 [shape = 'u32[]', space=smem, size = 0x4, offset = 0x4, fixed_abs, tag = 'smem constant byte address 0x4 - core index']
  #allocation1 [shape = 'u32[144,128]{1,0:T(1,128)}', space=vmem, size = 0x12000, scoped, tag = 'internal scratch']
  %s0 = inlined_call_operand.hbm [shape: f32[8,256], index: 0, kind: input, shape index: {}]
  %s1 = inlined_call_operand.hbm [shape: f32[8,256], index: 1, kind: output, shape index: {}]
  %s2 = sld [smem:[#allocation0]]
  $region18: #{tpu_custom_call.1} parent=0
    _
  %s4 = ssub.s32 1, %s2
  %s5 = scalar_select 0, %s4, %s2
  $region1: #{tpu_custom_call.1} parent=0
    #allocation2 [shape = 'u8[8192]{0}', space=vmem, size = 0x2000, scoped, tag = 'input window, operand 0, single buffered']
    #allocation3 [shape = 's32[1]{0}', space=sflag, size = 0x4, scoped, tag = 'scoped memory for tpu_custom_call.1']
    #allocation4 [shape = 's32[1]{0}', space=sflag, size = 0x4, scoped, tag = 'scoped memory for tpu_custom_call.1']
    #allocation5 [shape = 'u8[8192]{0}', space=vmem, size = 0x2000, scoped, tag = 'output window, operand 0, single buffered']
    %6 = vsyncpa [#allocation3], 0
    %7 = vsyncpa [#allocation4], 0
    // Predicated region
    $region2: #{tpu_custom_call.1} parent=1 // pred_check
      _
    $region3: #{tpu_custom_call.1} parent=1 // pred_check_branch
      %9 = sbr.rel (0) target = $region5
    $region4: #{tpu_custom_call.1} parent=1 // pred_region
      %s11 = ssub.s32 256, 256
      %12 = vsyncadd [#allocation3], %s11
      %s14 = sshll.u32 [#allocation2], 4
      %s15 = int_to_ptr.vmem [resolvable:$true] %s14
      %17 = dma.hbm_to_vmem [thread:$0]  %s0, 256, %s15, [#allocation3]
    $region5: #{tpu_custom_call.1} parent=1 // pred_fallthru
      _
    // Predicated region
    $region6: #{tpu_custom_call.1} parent=1 // pred_check
      _
    $region7: #{tpu_custom_call.1} parent=1 // pred_check_branch
      %19 = sbr.rel (0) target = $region9
    $region8: #{tpu_custom_call.1} parent=1 // pred_region
      %20 = dma.done [#allocation3], 256
    $region9: #{tpu_custom_call.1} parent=1 // pred_fallthru
      _
    %v21 = vld [vmem:[#allocation2] sm:$0xff]
    %v22 = vld [vmem:[#allocation2 + $0x8] sm:$0xff]
    %23 = vrot.lane.b32.xlu0 %v21, 1
    %v24 = vpop.permute.xlu0 %23
    %25 = vrot.lane.b32.xlu0 %v22, 1
    %v26 = vpop.permute.xlu0 %25
    %v27 = vlaneseq
    %v28 = vand.u32 %v27, 127
    %vm29 = vcmp.lt.s32.totalorder %v28, 1
    %v30 = vsel %vm29, %v24, %v26
    %v31 = vsel %vm29, %v26, %v24
    %32 = vst [vmem:[#allocation5] sm:$0xff] %v31
    %33 = vst [vmem:[#allocation5 + $0x8] sm:$0xff] %v30
    // Predicated region
    $region10: #{tpu_custom_call.1} parent=1 // pred_check
      _
    $region11: #{tpu_custom_call.1} parent=1 // pred_check_branch
      %35 = sbr.rel (0) target = $region13
    $region12: #{tpu_custom_call.1} parent=1 // pred_region
      %s37 = ssub.s32 256, 256
      %38 = vsyncadd [#allocation4], %s37
      %s40 = sshll.u32 [#allocation5], 4
      %s41 = int_to_ptr.vmem [resolvable:$true] %s40
      %43 = dma.vmem_to_hbm [thread:$0]  %s41, 256, %s1, [#allocation4]
    $region13: #{tpu_custom_call.1} parent=1 // pred_fallthru
      _
    // Predicated region
    $region14: #{tpu_custom_call.1} parent=1 // pred_check
      _
    $region15: #{tpu_custom_call.1} parent=1 // pred_check_branch
      %45 = sbr.rel (0) target = $region17
    $region16: #{tpu_custom_call.1} parent=1 // pred_region
      %46 = dma.done [#allocation4], 256
    $region17: #{tpu_custom_call.1} parent=1 // pred_fallthru
      _
    %47 = vsyncpa [#allocation3], 1
    %48 = vsyncpa [#allocation4], 1

// kernel: tpu_custom_call.1
$region0: #{tpu_custom_call.1}
  #allocation0 [shape = 'u32[]', space=smem, size = 0x4, offset = 0x4, fixed_abs, tag = 'smem constant byte address 0x4 - core index']
  #allocation1 [shape = 'u32[144,128]{1,0:T(1,128)}', space=vmem, size = 0x12000, scoped, tag = 'internal scratch']
  %s0 = inlined_call_operand.hbm [shape: f32[2,8,256], index: 0, kind: input, shape index: {}]
  %s1 = inlined_call_operand.hbm [shape: f32[16,128], index: 1, kind: input, shape index: {}]
  %s2 = inlined_call_operand.hbm [shape: f32[8,256], index: 2, kind: input, shape index: {}]
  %s3 = inlined_call_operand.hbm [shape: f32[2,8,256], index: 3, kind: output, shape index: {}]
  %s4 = sld [smem:[#allocation0]]
  $region57: #{tpu_custom_call.1} parent=0
    _
  %s6 = ssub.s32 1, %s4
  %s7 = scalar_select 0, %s6, %s4
  $region1: #{tpu_custom_call.1} parent=0
    #allocation2 [shape = 'u8[16384]{0}', space=vmem, size = 0x4000, scoped, tag = 'input window, operand 0']
    #allocation3 [shape = 's32[2]{0}', space=sflag, size = 0x8, scoped, tag = 'scoped memory for tpu_custom_call.1']
    #allocation4 [shape = 's32[2]{0}', space=sflag, size = 0x8, scoped, tag = 'scoped memory for tpu_custom_call.1']
    #allocation5 [shape = 'u8[8192]{0}', space=vmem, size = 0x2000, scoped, tag = 'input window, operand 1, single buffered']
    #allocation6 [shape = 's32[1]{0}', space=sflag, size = 0x4, scoped, tag = 'scoped memory for tpu_custom_call.1']
    #allocation7 [shape = 'u8[8192]{0}', space=vmem, size = 0x2000, scoped, tag = 'input window, operand 2, single buffered']
    #allocation8 [shape = 'u8[16384]{0}', space=vmem, size = 0x4000, scoped, tag = 'output window, operand 0']
    %8 = vsyncpa [#allocation3], 0
    %s9 = scalar_lea.sflag [#allocation3], 1
    %10 = vsyncpa %s9, 0
    %11 = vsyncpa [#allocation6], 0
    %12 = vsyncpa [#allocation4], 0
    %s13 = scalar_lea.sflag [#allocation4], 1
    %14 = vsyncpa %s13, 0
    loop: start=0, step=1, limit=4
    $region2: #{tpu_custom_call.1} parent=1 // loop_pre_header
      _
    $region3: #{tpu_custom_call.1} parent=1 // loop_header
      %s16 = sphi 0, %s20
      %p17 = scmp.ge.s32.totalorder %s16, 4
      %s26 = sphi 0, %s28
      %s29 = sphi 0, %s26
      %s30 = sphi 0, %s29
      %s46 = sphi 0, %s30
      %s50 = sphi 0, %s50
      %s52 = sphi 0, %s50
      %s53 = sphi 0, %s52
      %s67 = sphi 0, %s53
      %s71 = sphi 0, %s71
      %s73 = sphi 0, %s71
      %s74 = sphi 0, %s73
      %s88 = sphi 0, %s74
      %s94 = sphi 0, %s96
      %s97 = sphi 0, %s94
      %s98 = sphi 0, %s97
      %s114 = sphi 0, %s98
    $region4: #{tpu_custom_call.1} parent=1 // loop_header_branch
      %19 = sbr.rel (%p17) target = $region8
    $region5: #{tpu_custom_call.1} parent=1 // loop_body
      %s21 = ssub.s32 %s16, 1
      %s22 = ssub.s32 %s16, 2
      %s23 = sadd.s32 %s16, 1
      %s24 = ssub.s32 %s16, %s23
      %p25 = scmp.eq.s32.totalorder %s24, 0
      %s27 = sadd.s32 %s26, 1
      %s28 = scalar_select %p25, %s26, %s27
      %p31 = pneg %p25
      %p32 = scmp.eq.s32.totalorder %s16, 1
      %p33 = por %p31, %p32
      %p34 = scmp.ne.s32.totalorder %s26, %s29
      %p35 = scmp.eq.s32.totalorder %s16, 0
      %p36 = por %p34, %p35
      %p37 = scmp.ne.s32.totalorder %s26, %s29
      %p38 = scmp.eq.s32.totalorder %s21, 1
      %p39 = por %p37, %p38
      %p40 = scmp.ne.s32.totalorder %s29, %s30
      %p41 = scmp.eq.s32.totalorder %s21, 0
      %p42 = por %p40, %p41
      %p43 = scmp.ne.s32.totalorder %s29, %s30
      %p44 = scmp.eq.s32.totalorder %s22, 1
      %p45 = por %p43, %p44
      %p47 = scmp.ne.s32.totalorder %s30, %s46
      %p48 = scmp.eq.s32.totalorder %s22, 0
      %p49 = por %p47, %p48
      %s51 = sadd.s32 %s50, 1
      %p54 = scmp.eq.s32.totalorder %s16, 1
      %p55 = scmp.ne.s32.totalorder %s50, %s52
      %p56 = scmp.eq.s32.totalorder %s16, 0
      %p57 = por %p55, %p56
      %p58 = scmp.ne.s32.totalorder %s50, %s52
      %p59 = scmp.eq.s32.totalorder %s21, 1
      %p60 = por %p58, %p59
      %p61 = scmp.ne.s32.totalorder %s52, %s53
      %p62 = scmp.eq.s32.totalorder %s21, 0
      %p63 = por %p61, %p62
      %p64 = scmp.ne.s32.totalorder %s52, %s53
      %p65 = scmp.eq.s32.totalorder %s22, 1
      %p66 = por %p64, %p65
      %p68 = scmp.ne.s32.totalorder %s53, %s67
      %p69 = scmp.eq.s32.totalorder %s22, 0
      %p70 = por %p68, %p69
      %s72 = sadd.s32 %s71, 1
      %p75 = scmp.eq.s32.totalorder %s16, 1
      %p76 = scmp.ne.s32.totalorder %s71, %s73
      %p77 = scmp.eq.s32.totalorder %s16, 0
      %p78 = por %p76, %p77
      %p79 = scmp.ne.s32.totalorder %s71, %s73
      %p80 = scmp.eq.s32.totalorder %s21, 1
      %p81 = por %p79, %p80
      %p82 = scmp.ne.s32.totalorder %s73, %s74
      %p83 = scmp.eq.s32.totalorder %s21, 0
      %p84 = por %p82, %p83
      %p85 = scmp.ne.s32.totalorder %s73, %s74
      %p86 = scmp.eq.s32.totalorder %s22, 1
      %p87 = por %p85, %p86
      %p89 = scmp.ne.s32.totalorder %s74, %s88
      %p90 = scmp.eq.s32.totalorder %s22, 0
      %p91 = por %p89, %p90
      %s92 = ssub.s32 %s16, %s23
      %p93 = scmp.eq.s32.totalorder %s92, 0
      %s95 = sadd.s32 %s94, 1
      %s96 = scalar_select %p93, %s94, %s95
      %p99 = pneg %p93
      %p100 = scmp.eq.s32.totalorder %s16, 1
      %p101 = por %p99, %p100
      %p102 = scmp.ne.s32.totalorder %s94, %s97
      %p103 = scmp.eq.s32.totalorder %s16, 0
      %p104 = por %p102, %p103
      %p105 = scmp.ne.s32.totalorder %s94, %s97
      %p106 = scmp.eq.s32.totalorder %s21, 1
      %p107 = por %p105, %p106
      %p108 = scmp.ne.s32.totalorder %s97, %s98
      %p109 = scmp.eq.s32.totalorder %s21, 0
      %p110 = por %p108, %p109
      %p111 = scmp.ne.s32.totalorder %s97, %s98
      %p112 = scmp.eq.s32.totalorder %s22, 1
      %p113 = por %p111, %p112
      %p115 = scmp.ne.s32.totalorder %s98, %s114
      %p116 = scmp.eq.s32.totalorder %s22, 0
      %p117 = por %p115, %p116
      %p118 = scmp.le.s32.totalorder 1, %s16
      %p119 = scmp.lt.s32.totalorder %s16, 3
      %p120 = pnand %p118, %p119
      %p121 = pneg %p120
      // Predicated region
      $region9: #{tpu_custom_call.1} parent=5 // pred_check
        _
      $region10: #{tpu_custom_call.1} parent=5 // pred_check_branch
        %123 = sbr.rel (%p120) target = $region12
      $region11: #{tpu_custom_call.1} parent=5 // pred_region
        %s124 = ssub.s32 %s16, 1
        // Predicated region
        $region13: #{tpu_custom_call.1} parent=11 // pred_check
          %p125 = pneg %p63
        $region14: #{tpu_custom_call.1} parent=11 // pred_check_branch
          %127 = sbr.rel (%p125) target = $region16
        $region15: #{tpu_custom_call.1} parent=11 // pred_region
          %s129 = ssub.s32 256, 256
          %130 = vsyncadd [#allocation6], %s129
          %s131 = sshll.u32 [#allocation5], 4
          %s132 = int_to_ptr.vmem [resolvable:$true] %s131
          %137 = dma.hbm_to_vmem [thread:$0]  %s1, 256, %s132, [#allocation6], 128, 128, 8
        $region16: #{tpu_custom_call.1} parent=11 // pred_fallthru
          _
        // Predicated region
        $region17: #{tpu_custom_call.1} parent=11 // pred_check
          %p138 = pneg %p84
        $region18: #{tpu_custom_call.1} parent=11 // pred_check_branch
          %140 = sbr.rel (%p138) target = $region20
        $region19: #{tpu_custom_call.1} parent=11 // pred_region
          %s142 = ssub.s32 256, 256
          %143 = vsyncadd [#allocation6], %s142
          %s145 = sshll.u32 [#allocation7], 4
          %s146 = int_to_ptr.vmem [resolvable:$true] %s145
          %148 = dma.hbm_to_vmem [thread:$0]  %s2, 256, %s146, [#allocation6]
        $region20: #{tpu_custom_call.1} parent=11 // pred_fallthru
          _
      $region12: #{tpu_custom_call.1} parent=5 // pred_fallthru
        _
      %p149 = scmp.lt.s32.totalorder %s16, 2
      // Predicated region
      $region21: #{tpu_custom_call.1} parent=5 // pred_check
        %p150 = pneg %p149
      $region22: #{tpu_custom_call.1} parent=5 // pred_check_branch
        %152 = sbr.rel (%p150) target = $region24
      $region23: #{tpu_custom_call.1} parent=5 // pred_region
        // Predicated region
        $region25: #{tpu_custom_call.1} parent=23 // pred_check
          %p153 = pneg %p36
        $region26: #{tpu_custom_call.1} parent=23 // pred_check_branch
          %155 = sbr.rel (%p153) target = $region28
        $region27: #{tpu_custom_call.1} parent=23 // pred_region
          %s156 = sand.u32 %s26, 1
          %s157 = scalar_lea.sflag [#allocation3], %s156
          %s158 = sand.u32 %s26, 1
          %s159 = smul.addr %s158, 16
          %s160 = scalar_lea.vmem [#allocation2], %s159
          %s162 = ssub.s32 256, 256
          %163 = vsyncadd %s157, %s162
          %s164 = smul.addr %s16, 2
          %s165 = smul.addr %s164, 128
          %s166 = scalar_lea.hbm %s0, %s165
          %s168 = sshll.u32 %s160, 4
          %s169 = int_to_ptr.vmem [resolvable:$true] %s168
          %171 = dma.hbm_to_vmem [thread:$0]  %s166, 256, %s169, %s157
        $region28: #{tpu_custom_call.1} parent=23 // pred_fallthru
          _
      $region24: #{tpu_custom_call.1} parent=5 // pred_fallthru
        _
      %p172 = scmp.le.s32.totalorder 1, %s16
      %p173 = scmp.lt.s32.totalorder %s16, 3
      %p174 = pnand %p172, %p173
      %p175 = pneg %p174
      // Predicated region
      $region29: #{tpu_custom_call.1} parent=5 // pred_check
        _
      $region30: #{tpu_custom_call.1} parent=5 // pred_check_branch
        %177 = sbr.rel (%p174) target = $region32
      $region31: #{tpu_custom_call.1} parent=5 // pred_region
        %s178 = ssub.s32 %s16, 1
        %s179 = sand.u32 %s29, 1
        %s180 = scalar_lea.sflag [#allocation3], %s179
        %s181 = sand.u32 %s29, 1
        %s182 = smul.addr %s181, 16
        %s183 = scalar_lea.vmem [#allocation2], %s182
        // Predicated region
        $region33: #{tpu_custom_call.1} parent=31 // pred_check
          %p184 = pneg %p42
        $region34: #{tpu_custom_call.1} parent=31 // pred_check_branch
          %186 = sbr.rel (%p184) target = $region36
        $region35: #{tpu_custom_call.1} parent=31 // pred_region
          %187 = dma.done %s180, 256
        $region36: #{tpu_custom_call.1} parent=31 // pred_fallthru
          _
        // Predicated region
        $region37: #{tpu_custom_call.1} parent=31 // pred_check
          %p188 = pneg %p63
        $region38: #{tpu_custom_call.1} parent=31 // pred_check_branch
          %190 = sbr.rel (%p188) target = $region40
        $region39: #{tpu_custom_call.1} parent=31 // pred_region
          %191 = dma.done [#allocation6], 256
        $region40: #{tpu_custom_call.1} parent=31 // pred_fallthru
          _
        // Predicated region
        $region41: #{tpu_custom_call.1} parent=31 // pred_check
          %p192 = pneg %p84
        $region42: #{tpu_custom_call.1} parent=31 // pred_check_branch
          %194 = sbr.rel (%p192) target = $region44
        $region43: #{tpu_custom_call.1} parent=31 // pred_region
          %195 = dma.done [#allocation6], 256
        $region44: #{tpu_custom_call.1} parent=31 // pred_fallthru
          _
        %s196 = sand.u32 %s29, 1
        %s197 = scalar_lea.sflag [#allocation3], %s196
        %s198 = sand.u32 %s29, 1
        %s199 = smul.addr %s198, 16
        %s200 = scalar_lea.vmem [#allocation2], %s199
        %p201 = pneg %p42
        %p202 = pneg %p39
        %p203 = pneg %p63
        %p204 = pneg %p60
        %p205 = pneg %p84
        %p206 = pneg %p81
        %p207 = pneg %p110
        %p208 = pneg %p107
        %s209 = sand.u32 %s97, 1
        %s210 = scalar_lea.sflag [#allocation4], %s209
        %s211 = sand.u32 %s97, 1
        %s212 = smul.addr %s211, 16
        %s213 = scalar_lea.vmem [#allocation8], %s212
        %v214 = vld [vmem:[#allocation5] sm:$0xff]
        %v215 = vld [vmem:[#allocation5 + $0x8] sm:$0xff]
        %217 = vset.pattern.permute.xlu0 33
        %218 = vperm.xlu0 %217, %v214
        %v219 = vpop.permute.xlu0 %218
        %222 = vset.pattern.permute.xlu0 33
        %223 = vperm.xlu0 %222, %v215
        %v224 = vpop.permute.xlu0 %223
        %226 = vset.pattern.permute.xlu0 34
        %227 = vperm.xlu0 %226, %v214
        %v228 = vpop.permute.xlu0 %227
        %230 = vset.pattern.permute.xlu0 34
        %231 = vperm.xlu0 %230, %v215
        %v232 = vpop.permute.xlu0 %231
        %234 = vset.pattern.permute.xlu0 35
        %235 = vperm.xlu0 %234, %v214
        %v236 = vpop.permute.xlu0 %235
        %238 = vset.pattern.permute.xlu0 12
        %239 = vperm.xlu0 %238, %v214
        %v240 = vpop.permute.xlu0 %239
        %242 = vset.pattern.permute.xlu0 12
        %243 = vperm.xlu0 %242, %v215
        %v244 = vpop.permute.xlu0 %243
        %v246 = vld [vmem:[#allocation7] ss:$8 sm:$0x3]
        %247 = vset.pattern.permute.xlu0 8
        %248 = vperm.xlu0 %247, %v214
        %v249 = vpop.permute.xlu0 %248
        %251 = vset.pattern.permute.xlu0 8
        %252 = vperm.xlu0 %251, %v215
        %v253 = vpop.permute.xlu0 %252
        %v256 = vlaneseq
        %v257 = vshrl.u32 %v256, 7
        %v258 = vsub.s32 0, %v257
        %v259 = vrot.slane %v246, %v258
        %v260 = vlaneseq
        %v261 = vshrl.u32 %v260, 7
        %v262 = vsub.s32 1, %v261
        %v263 = vrot.slane %v246, %v262
        %v266 = vmul.f32 %v249, %v259
        %v267 = vmul.f32 %v249, %v263
        %v268 = vmul.f32 %v253, %v259
        %v269 = vmul.f32 %v253, %v263
        %s270 = scalar_lea.vmem [#allocation7], 1
        %v271 = vld [vmem:[%s270] ss:$8 sm:$0x3]
        %272 = vset.pattern.permute.xlu0 9
        %273 = vperm.xlu0 %272, %v214
        %v274 = vpop.permute.xlu0 %273
        %276 = vset.pattern.permute.xlu0 9
        %277 = vperm.xlu0 %276, %v215
        %v278 = vpop.permute.xlu0 %277
        %v281 = vlaneseq
        %v282 = vshrl.u32 %v281, 7
        %v283 = vsub.s32 0, %v282
        %v284 = vrot.slane %v271, %v283
        %v285 = vlaneseq
        %v286 = vshrl.u32 %v285, 7
        %v287 = vsub.s32 1, %v286
        %v288 = vrot.slane %v271, %v287
        %v291 = vmul.f32 %v274, %v284
        %v292 = vmul.f32 %v274, %v288
        %v293 = vmul.f32 %v278, %v284
        %v294 = vmul.f32 %v278, %v288
        %s295 = scalar_lea.vmem [#allocation7], 2
        %v296 = vld [vmem:[%s295] ss:$8 sm:$0x3]
        %297 = vset.pattern.permute.xlu0 10
        %298 = vperm.xlu0 %297, %v214
        %v299 = vpop.permute.xlu0 %298
        %301 = vset.pattern.permute.xlu0 10
        %302 = vperm.xlu0 %301, %v215
        %v303 = vpop.permute.xlu0 %302
        %v306 = vlaneseq
        %v307 = vshrl.u32 %v306, 7
        %v308 = vsub.s32 0, %v307
        %v309 = vrot.slane %v296, %v308
        %v310 = vlaneseq
        %v311 = vshrl.u32 %v310, 7
        %v312 = vsub.s32 1, %v311
        %v313 = vrot.slane %v296, %v312
        %v316 = vmul.f32 %v299, %v309
        %v317 = vmul.f32 %v299, %v313
        %v318 = vmul.f32 %v303, %v309
        %v319 = vmul.f32 %v303, %v313
        %s320 = scalar_lea.vmem [#allocation7], 3
        %v321 = vld [vmem:[%s320] ss:$8 sm:$0x3]
        %322 = vset.pattern.permute.xlu0 11
        %323 = vperm.xlu0 %322, %v214
        %v324 = vpop.permute.xlu0 %323
        %326 = vset.pattern.permute.xlu0 11
        %327 = vperm.xlu0 %326, %v215
        %v328 = vpop.permute.xlu0 %327
        %v331 = vlaneseq
        %v332 = vshrl.u32 %v331, 7
        %v333 = vsub.s32 0, %v332
        %v334 = vrot.slane %v321, %v333
        %v335 = vlaneseq
        %v336 = vshrl.u32 %v335, 7
        %v337 = vsub.s32 1, %v336
        %v338 = vrot.slane %v321, %v337
        %v341 = vmul.f32 %v324, %v334
        %v342 = vmul.f32 %v324, %v338
        %v343 = vmul.f32 %v328, %v334
        %v344 = vmul.f32 %v328, %v338
        %s345 = scalar_lea.vmem [#allocation7], 4
        %v346 = vld [vmem:[%s345] ss:$8 sm:$0x3]
        %347 = vset.pattern.permute.xlu0 13
        %348 = vperm.xlu0 %347, %v214
        %v349 = vpop.permute.xlu0 %348
        %351 = vset.pattern.permute.xlu0 13
        %352 = vperm.xlu0 %351, %v215
        %v353 = vpop.permute.xlu0 %352
        %v356 = vlaneseq
        %v357 = vshrl.u32 %v356, 7
        %v358 = vsub.s32 0, %v357
        %v359 = vrot.slane %v346, %v358
        %v360 = vlaneseq
        %v361 = vshrl.u32 %v360, 7
        %v362 = vsub.s32 1, %v361
        %v363 = vrot.slane %v346, %v362
        %v366 = vmul.f32 %v349, %v359
        %v367 = vmul.f32 %v349, %v363
        %v368 = vmul.f32 %v353, %v359
        %v369 = vmul.f32 %v353, %v363
        %s370 = scalar_lea.vmem [#allocation7], 5
        %v371 = vld [vmem:[%s370] ss:$8 sm:$0x3]
        %372 = vset.pattern.permute.xlu0 14
        %373 = vperm.xlu0 %372, %v214
        %v374 = vpop.permute.xlu0 %373
        %376 = vset.pattern.permute.xlu0 14
        %377 = vperm.xlu0 %376, %v215
        %v378 = vpop.permute.xlu0 %377
        %v381 = vlaneseq
        %v382 = vshrl.u32 %v381, 7
        %v383 = vsub.s32 0, %v382
        %v384 = vrot.slane %v371, %v383
        %v385 = vlaneseq
        %v386 = vshrl.u32 %v385, 7
        %v387 = vsub.s32 1, %v386
        %v388 = vrot.slane %v371, %v387
        %v391 = vmul.f32 %v374, %v384
        %v392 = vmul.f32 %v374, %v388
        %v393 = vmul.f32 %v378, %v384
        %v394 = vmul.f32 %v378, %v388
        %s395 = scalar_lea.vmem [#allocation7], 6
        %v396 = vld [vmem:[%s395] ss:$8 sm:$0x3]
        %397 = vset.pattern.permute.xlu0 15
        %398 = vperm.xlu0 %397, %v214
        %v399 = vpop.permute.xlu0 %398
        %401 = vset.pattern.permute.xlu0 15
        %402 = vperm.xlu0 %401, %v215
        %v403 = vpop.permute.xlu0 %402
        %v406 = vlaneseq
        %v407 = vshrl.u32 %v406, 7
        %v408 = vsub.s32 0, %v407
        %v409 = vrot.slane %v396, %v408
        %v410 = vlaneseq
        %v411 = vshrl.u32 %v410, 7
        %v412 = vsub.s32 1, %v411
        %v413 = vrot.slane %v396, %v412
        %v416 = vmul.f32 %v399, %v409
        %v417 = vmul.f32 %v399, %v413
        %v418 = vmul.f32 %v403, %v409
        %v419 = vmul.f32 %v403, %v413
        %s420 = scalar_lea.vmem [#allocation7], 7
        %v421 = vld [vmem:[%s420] ss:$8 sm:$0x3]
        %422 = vset.pattern.permute.xlu0 16
        %423 = vperm.xlu0 %422, %v214
        %v424 = vpop.permute.xlu0 %423
        %426 = vset.pattern.permute.xlu0 16
        %427 = vperm.xlu0 %426, %v215
        %v428 = vpop.permute.xlu0 %427
        %v431 = vlaneseq
        %v432 = vshrl.u32 %v431, 7
        %v433 = vsub.s32 0, %v432
        %v434 = vrot.slane %v421, %v433
        %v435 = vlaneseq
        %v436 = vshrl.u32 %v435, 7
        %v437 = vsub.s32 1, %v436
        %v438 = vrot.slane %v421, %v437
        %v441 = vmul.f32 %v424, %v434
        %v442 = vmul.f32 %v424, %v438
        %v443 = vmul.f32 %v428, %v434
        %v444 = vmul.f32 %v428, %v438
        %v445 = vld [vmem:[%s183] sm:$0xff]
        %v446 = vld [vmem:[%s183 + $0x8] sm:$0xff]
        %vm447 = vcmask 64512
        %v448 = vsel %vm447, %v214, 0
        %v450 = vsel %vm447, %v215, 0
        %452 = vmatprep.subr.mxu0 %v446
        %453 = vmatpush1.msra.mxu0 %v445
        %454 = vmatprep.subr.mxu0 0.0
        %455 = vmatpush1.msra.mxu0 0.0
        %456 = vmatprep.subr.mxu0 0.0
        %457 = vmatpush1.msra.mxu0 0.0
        %458 = vmatprep.subr.mxu0 0.0
        %459 = vmatpush1.msra.mxu0 0.0
        %460 = vmatprep.subr.mxu0 0.0
        %461 = vmatpush1.msra.mxu0 0.0
        %462 = vmatprep.subr.mxu0 0.0
        %463 = vmatpush1.msra.mxu0 0.0
        %464 = vmatprep.subr.mxu0 0.0
        %465 = vmatpush1.msra.mxu0 0.0
        %466 = vmatprep.subr.mxu0 0.0
        %467 = vmatpush1.msra.mxu0 0.0
        %468 = vmatprep.subr.mxu0 0.0
        %469 = vmatpush1.msra.mxu0 0.0
        %470 = vmatprep.subr.mxu0 0.0
        %471 = vmatpush1.msra.mxu0 0.0
        %472 = vmatprep.subr.mxu0 0.0
        %473 = vmatpush1.msra.mxu0 0.0
        %474 = vmatprep.subr.mxu0 0.0
        %475 = vmatpush1.msra.mxu0 0.0
        %476 = vmatprep.subr.mxu0 0.0
        %477 = vmatpush1.msra.mxu0 0.0
        %478 = vmatprep.subr.mxu0 0.0
        %479 = vmatpush1.msra.mxu0 0.0
        %480 = vmatprep.subr.mxu0 0.0
        %481 = vmatpush1.msra.mxu0 0.0
        %482 = vmatprep.subr.mxu0 0.0
        %483 = vmatpush1.msra.mxu0 0.0
        %484 = vmatprep.subr.mxu0 0.0
        %485 = vmatpush1.msra.mxu0 0.0
        %486 = vmatprep.subr.mxu0 0.0
        %487 = vmatpush1.msra.mxu0 0.0
        %488 = vmatprep.subr.mxu0 0.0
        %489 = vmatpush1.msra.mxu0 0.0
        %490 = vmatprep.subr.mxu0 0.0
        %491 = vmatpush1.msra.mxu0 0.0
        %492 = vmatprep.subr.mxu0 0.0
        %493 = vmatpush1.msra.mxu0 0.0
        %494 = vmatprep.subr.mxu0 0.0
        %495 = vmatpush1.msra.mxu0 0.0
        %496 = vmatprep.subr.mxu0 0.0
        %497 = vmatpush1.msra.mxu0 0.0
        %498 = vmatprep.subr.mxu0 0.0
        %499 = vmatpush1.msra.mxu0 0.0
        %500 = vmatprep.subr.mxu0 0.0
        %501 = vmatpush1.msra.mxu0 0.0
        %502 = vmatprep.subr.mxu0 0.0
        %503 = vmatpush1.msra.mxu0 0.0
        %504 = vmatprep.subr.mxu0 0.0
        %505 = vmatpush1.msra.mxu0 0.0
        %506 = vmatprep.subr.mxu0 0.0
        %507 = vmatpush1.msra.mxu0 0.0
        %508 = vmatprep.subr.mxu0 0.0
        %509 = vmatpush1.msra.mxu0 0.0
        %510 = vmatprep.subr.mxu0 0.0
        %511 = vmatpush1.msra.mxu0 0.0
        %512 = vmatprep.subr.mxu0 0.0
        %513 = vmatpush1.msra.mxu0 0.0
        %514 = vmatprep.subr.mxu0 0.0
        %515 = vmatpush1.msra.mxu0 0.0
        %516 = vmatprep.mubr.f32.mxu0 0.0
        %517 = vmatmul.mubr.f32.gmra.mrb[0].mxu0 %v448
        %v518 = vpop.f32.mrb[0].mxu0
        %v519 = vadd.f32 %v219, %v518
        %v520 = vpop.f32.mrb[0].mxu0
        %v521 = vadd.f32 %v219, %v520
        %522 = vmatprep.mubr.f32.mxu0 0.0
        %523 = vmatmul.mubr.f32.gmra.mrb[0].mxu0 %v450
        %v524 = vpop.f32.mrb[0].mxu0
        %v525 = vadd.f32 %v224, %v524
        %v526 = vpop.f32.mrb[0].mxu0
        %v527 = vadd.f32 %v224, %v526
        %528 = vdwg.mxu0
        %v529 = vmax.f32 %v519, 0.0
        %v530 = vmax.f32 %v521, 0.0
        %v531 = vmax.f32 %v525, 0.0
        %v532 = vmax.f32 %v527, 0.0
        %v533 = vmin.f32 %v529, 6.0
        %v534 = vmin.f32 %v530, 6.0
        %v535 = vmin.f32 %v531, 6.0
        %v536 = vmin.f32 %v532, 6.0
        %v537 = vmul.f32 %v533, %v240
        %v538 = vmul.f32 %v534, %v240
        %v539 = vmul.f32 %v535, %v244
        %v540 = vmul.f32 %v536, %v244
        %543 = vrot.lane.b32.xlu0 %v534, 17
        %v544 = vpop.permute.xlu0 %543
        %545 = vrot.lane.b32.xlu0 %v536, 17
        %v546 = vpop.permute.xlu0 %545
        %551 = vrot.lane.b32.xlu0 %v533, 17
        %v552 = vpop.permute.xlu0 %551
        %553 = vrot.lane.b32.xlu0 %v535, 17
        %v554 = vpop.permute.xlu0 %553
        %vm555 = vcmask 138240
        %v556 = vsel %vm555, %v552, %v544
        %v557 = vsel %vm555, %v554, %v546
        %v562 = vsel %vm555, %v544, %v552
        %v563 = vsel %vm555, %v546, %v554
        %v564 = vmul.f32 %v562, %v266
        %v565 = vmul.f32 %v556, %v267
        %v566 = vmul.f32 %v563, %v268
        %v567 = vmul.f32 %v557, %v269
        %v568 = vadd.f32 %v537, %v564
        %v569 = vadd.f32 %v538, %v565
        %v570 = vadd.f32 %v539, %v566
        %v571 = vadd.f32 %v540, %v567
        %572 = vrot.lane.b32.xlu0 %v534, 16
        %v573 = vpop.permute.xlu0 %572
        %574 = vrot.lane.b32.xlu0 %v536, 16
        %v575 = vpop.permute.xlu0 %574
        %578 = vrot.lane.b32.xlu0 %v533, 16
        %v579 = vpop.permute.xlu0 %578
        %580 = vrot.lane.b32.xlu0 %v535, 16
        %v581 = vpop.permute.xlu0 %580
        %vm582 = vcmask 130048
        %v583 = vsel %vm582, %v579, %v573
        %v584 = vsel %vm582, %v581, %v575
        %v589 = vsel %vm582, %v573, %v579
        %v590 = vsel %vm582, %v575, %v581
        %v591 = vmul.f32 %v589, %v291
        %v592 = vmul.f32 %v583, %v292
        %v593 = vmul.f32 %v590, %v293
        %v594 = vmul.f32 %v584, %v294
        %v595 = vadd.f32 %v568, %v591
        %v596 = vadd.f32 %v569, %v592
        %v597 = vadd.f32 %v570, %v593
        %v598 = vadd.f32 %v571, %v594
        %599 = vrot.lane.b32.xlu0 %v534, 15
        %v600 = vpop.permute.xlu0 %599
        %601 = vrot.lane.b32.xlu0 %v536, 15
        %v602 = vpop.permute.xlu0 %601
        %605 = vrot.lane.b32.xlu0 %v533, 15
        %v606 = vpop.permute.xlu0 %605
        %607 = vrot.lane.b32.xlu0 %v535, 15
        %v608 = vpop.permute.xlu0 %607
        %vm609 = vcmask 121856
        %v610 = vsel %vm609, %v606, %v600
        %v611 = vsel %vm609, %v608, %v602
        %v616 = vsel %vm609, %v600, %v606
        %v617 = vsel %vm609, %v602, %v608
        %v618 = vmul.f32 %v616, %v316
        %v619 = vmul.f32 %v610, %v317
        %v620 = vmul.f32 %v617, %v318
        %v621 = vmul.f32 %v611, %v319
        %v622 = vadd.f32 %v595, %v618
        %v623 = vadd.f32 %v596, %v619
        %v624 = vadd.f32 %v597, %v620
        %v625 = vadd.f32 %v598, %v621
        %626 = vrot.lane.b32.xlu0 %v534, 1
        %v627 = vpop.permute.xlu0 %626
        %628 = vrot.lane.b32.xlu0 %v536, 1
        %v629 = vpop.permute.xlu0 %628
        %632 = vrot.lane.b32.xlu0 %v533, 1
        %v633 = vpop.permute.xlu0 %632
        %634 = vrot.lane.b32.xlu0 %v535, 1
        %v635 = vpop.permute.xlu0 %634
        %vm636 = vcmask 7168
        %v637 = vsel %vm636, %v633, %v627
        %v638 = vsel %vm636, %v635, %v629
        %v643 = vsel %vm636, %v627, %v633
        %v644 = vsel %vm636, %v629, %v635
        %v645 = vmul.f32 %v643, %v341
        %v646 = vmul.f32 %v637, %v342
        %v647 = vmul.f32 %v644, %v343
        %v648 = vmul.f32 %v638, %v344
        %v649 = vadd.f32 %v622, %v645
        %v650 = vadd.f32 %v623, %v646
        %v651 = vadd.f32 %v624, %v647
        %v652 = vadd.f32 %v625, %v648
        %653 = vrot.lane.b32.xlu0 %v533, 127
        %v654 = vpop.permute.xlu0 %653
        %655 = vrot.lane.b32.xlu0 %v534, 127
        %v656 = vpop.permute.xlu0 %655
        %657 = vrot.lane.b32.xlu0 %v535, 127
        %v658 = vpop.permute.xlu0 %657
        %659 = vrot.lane.b32.xlu0 %v536, 127
        %v660 = vpop.permute.xlu0 %659
        %vm661 = vcmask 1039360
        %v662 = vsel %vm661, %v654, %v656
        %v663 = vsel %vm661, %v658, %v660
        %v670 = vsel %vm661, %v656, %v654
        %v671 = vsel %vm661, %v660, %v658
        %v672 = vmul.f32 %v662, %v366
        %v673 = vmul.f32 %v670, %v367
        %v674 = vmul.f32 %v663, %v368
        %v675 = vmul.f32 %v671, %v369
        %v676 = vadd.f32 %v649, %v672
        %v677 = vadd.f32 %v650, %v673
        %v678 = vadd.f32 %v651, %v674
        %v679 = vadd.f32 %v652, %v675
        %680 = vrot.lane.b32.xlu0 %v533, 113
        %v681 = vpop.permute.xlu0 %680
        %682 = vrot.lane.b32.xlu0 %v534, 113
        %v683 = vpop.permute.xlu0 %682
        %684 = vrot.lane.b32.xlu0 %v535, 113
        %v685 = vpop.permute.xlu0 %684
        %686 = vrot.lane.b32.xlu0 %v536, 113
        %v687 = vpop.permute.xlu0 %686
        %vm688 = vcmask 924672
        %v689 = vsel %vm688, %v681, %v683
        %v690 = vsel %vm688, %v685, %v687
        %v697 = vsel %vm688, %v683, %v681
        %v698 = vsel %vm688, %v687, %v685
        %v699 = vmul.f32 %v689, %v391
        %v700 = vmul.f32 %v697, %v392
        %v701 = vmul.f32 %v690, %v393
        %v702 = vmul.f32 %v698, %v394
        %v703 = vadd.f32 %v676, %v699
        %v704 = vadd.f32 %v677, %v700
        %v705 = vadd.f32 %v678, %v701
        %v706 = vadd.f32 %v679, %v702
        %707 = vrot.lane.b32.xlu0 %v533, 112
        %v708 = vpop.permute.xlu0 %707
        %709 = vrot.lane.b32.xlu0 %v534, 112
        %v710 = vpop.permute.xlu0 %709
        %711 = vrot.lane.b32.xlu0 %v535, 112
        %v712 = vpop.permute.xlu0 %711
        %713 = vrot.lane.b32.xlu0 %v536, 112
        %v714 = vpop.permute.xlu0 %713
        %vm715 = vcmask 916480
        %v716 = vsel %vm715, %v708, %v710
        %v717 = vsel %vm715, %v712, %v714
        %v724 = vsel %vm715, %v710, %v708
        %v725 = vsel %vm715, %v714, %v712
        %v726 = vmul.f32 %v716, %v416
        %v727 = vmul.f32 %v724, %v417
        %v728 = vmul.f32 %v717, %v418
        %v729 = vmul.f32 %v725, %v419
        %v730 = vadd.f32 %v703, %v726
        %v731 = vadd.f32 %v704, %v727
        %v732 = vadd.f32 %v705, %v728
        %v733 = vadd.f32 %v706, %v729
        %734 = vrot.lane.b32.xlu0 %v533, 111
        %v735 = vpop.permute.xlu0 %734
        %736 = vrot.lane.b32.xlu0 %v534, 111
        %v737 = vpop.permute.xlu0 %736
        %738 = vrot.lane.b32.xlu0 %v535, 111
        %v739 = vpop.permute.xlu0 %738
        %740 = vrot.lane.b32.xlu0 %v536, 111
        %v741 = vpop.permute.xlu0 %740
        %vm742 = vcmask 908288
        %v743 = vsel %vm742, %v735, %v737
        %v744 = vsel %vm742, %v739, %v741
        %v751 = vsel %vm742, %v737, %v735
        %v752 = vsel %vm742, %v741, %v739
        %v753 = vmul.f32 %v743, %v441
        %v754 = vmul.f32 %v751, %v442
        %v755 = vmul.f32 %v744, %v443
        %v756 = vmul.f32 %v752, %v444
        %v757 = vadd.f32 %v730, %v753
        %v758 = vadd.f32 %v731, %v754
        %v759 = vadd.f32 %v732, %v755
        %v760 = vadd.f32 %v733, %v756
        %v761 = vadd.f32 %v757, %v228
        %v762 = vadd.f32 %v758, %v228
        %v763 = vadd.f32 %v759, %v232
        %v764 = vadd.f32 %v760, %v232
        %v765 = vmax.f32 %v761, 0.0
        %v766 = vmax.f32 %v762, 0.0
        %v767 = vmax.f32 %v763, 0.0
        %v768 = vmax.f32 %v764, 0.0
        %v769 = vmin.f32 %v765, 6.0
        %v770 = vmin.f32 %v766, 6.0
        %v771 = vmin.f32 %v767, 6.0
        %v772 = vmin.f32 %v768, 6.0
        %773 = vrot.lane.b32.xlu0 %v214, 111
        %v774 = vpop.permute.xlu0 %773
        %v775 = vsel %vm582, %v774, 0
        %777 = vmatprep.subr.mxu0 %v770
        %778 = vmatpush1.msra.mxu0 %v769
        %779 = vmatprep.subr.mxu0 %v772
        %780 = vmatpush1.msra.mxu0 %v771
        %781 = vmatprep.subr.mxu0 0.0
        %782 = vmatpush1.msra.mxu0 0.0
        %783 = vmatprep.subr.mxu0 0.0
        %784 = vmatpush1.msra.mxu0 0.0
        %785 = vmatprep.subr.mxu0 0.0
        %786 = vmatpush1.msra.mxu0 0.0
        %787 = vmatprep.subr.mxu0 0.0
        %788 = vmatpush1.msra.mxu0 0.0
        %789 = vmatprep.subr.mxu0 0.0
        %790 = vmatpush1.msra.mxu0 0.0
        %791 = vmatprep.subr.mxu0 0.0
        %792 = vmatpush1.msra.mxu0 0.0
        %793 = vmatprep.subr.mxu0 0.0
        %794 = vmatpush1.msra.mxu0 0.0
        %795 = vmatprep.subr.mxu0 0.0
        %796 = vmatpush1.msra.mxu0 0.0
        %797 = vmatprep.subr.mxu0 0.0
        %798 = vmatpush1.msra.mxu0 0.0
        %799 = vmatprep.subr.mxu0 0.0
        %800 = vmatpush1.msra.mxu0 0.0
        %801 = vmatprep.subr.mxu0 0.0
        %802 = vmatpush1.msra.mxu0 0.0
        %803 = vmatprep.subr.mxu0 0.0
        %804 = vmatpush1.msra.mxu0 0.0
        %805 = vmatprep.subr.mxu0 0.0
        %806 = vmatpush1.msra.mxu0 0.0
        %807 = vmatprep.subr.mxu0 0.0
        %808 = vmatpush1.msra.mxu0 0.0
        %809 = vmatprep.subr.mxu0 0.0
        %810 = vmatpush1.msra.mxu0 0.0
        %811 = vmatprep.subr.mxu0 0.0
        %812 = vmatpush1.msra.mxu0 0.0
        %813 = vmatprep.subr.mxu0 0.0
        %814 = vmatpush1.msra.mxu0 0.0
        %815 = vmatprep.subr.mxu0 0.0
        %816 = vmatpush1.msra.mxu0 0.0
        %817 = vmatprep.subr.mxu0 0.0
        %818 = vmatpush1.msra.mxu0 0.0
        %819 = vmatprep.subr.mxu0 0.0
        %820 = vmatpush1.msra.mxu0 0.0
        %821 = vmatprep.subr.mxu0 0.0
        %822 = vmatpush1.msra.mxu0 0.0
        %823 = vmatprep.subr.mxu0 0.0
        %824 = vmatpush1.msra.mxu0 0.0
        %825 = vmatprep.subr.mxu0 0.0
        %826 = vmatpush1.msra.mxu0 0.0
        %827 = vmatprep.subr.mxu0 0.0
        %828 = vmatpush1.msra.mxu0 0.0
        %829 = vmatprep.subr.mxu0 0.0
        %830 = vmatpush1.msra.mxu0 0.0
        %831 = vmatprep.subr.mxu0 0.0
        %832 = vmatpush1.msra.mxu0 0.0
        %833 = vmatprep.subr.mxu0 0.0
        %834 = vmatpush1.msra.mxu0 0.0
        %835 = vmatprep.subr.mxu0 0.0
        %836 = vmatpush1.msra.mxu0 0.0
        %837 = vmatprep.subr.mxu0 0.0
        %838 = vmatpush1.msra.mxu0 0.0
        %839 = vmatprep.subr.mxu0 0.0
        %840 = vmatpush1.msra.mxu0 0.0
        %841 = vmatprep.mubr.f32.mxu0 0.0
        %842 = vmatmul.mubr.f32.gmra.mrb[0].mxu0 %v775
        %v843 = vpop.f32.mrb[0].mxu0
        %v844 = vadd.f32 %v236, %v843
        %v845 = vpop.f32.mrb[0].mxu0
        %v846 = vadd.f32 %v236, %v845
        %847 = vdwg.mxu0
        %v848 = vadd.f32 %v844, %v445
        %v849 = vadd.f32 %v846, %v446
        %850 = vst [vmem:[%s213] sm:$0xff] %v848
        %851 = vst [vmem:[%s213 + $0x8] sm:$0xff] %v849
        %s852 = sand.u32 %s97, 1
        %s853 = scalar_lea.sflag [#allocation4], %s852
        %s854 = sand.u32 %s97, 1
        %s855 = smul.addr %s854, 16
        %s856 = scalar_lea.vmem [#allocation8], %s855
        // Predicated region
        $region45: #{tpu_custom_call.1} parent=31 // pred_check
          %p857 = pneg %p107
        $region46: #{tpu_custom_call.1} parent=31 // pred_check_branch
          %859 = sbr.rel (%p857) target = $region48
        $region47: #{tpu_custom_call.1} parent=31 // pred_region
          %s861 = ssub.s32 256, 256
          %862 = vsyncadd %s853, %s861
          %s863 = smul.addr %s21, 2
          %s864 = smul.addr %s863, 128
          %s865 = scalar_lea.hbm %s3, %s864
          %s867 = sshll.u32 %s856, 4
          %s868 = int_to_ptr.vmem [resolvable:$true] %s867
          %870 = dma.vmem_to_hbm [thread:$0]  %s868, 256, %s865, %s853
        $region48: #{tpu_custom_call.1} parent=31 // pred_fallthru
          _
      $region32: #{tpu_custom_call.1} parent=5 // pred_fallthru
        _
      %p871 = scmp.le.s32.totalorder 2, %s16
      // Predicated region
      $region49: #{tpu_custom_call.1} parent=5 // pred_check
        %p872 = pneg %p871
      $region50: #{tpu_custom_call.1} parent=5 // pred_check_branch
        %874 = sbr.rel (%p872) target = $region52
      $region51: #{tpu_custom_call.1} parent=5 // pred_region
        %s875 = ssub.s32 %s16, 2
        // Predicated region
        $region53: #{tpu_custom_call.1} parent=51 // pred_check
          %p876 = pneg %p113
        $region54: #{tpu_custom_call.1} parent=51 // pred_check_branch
          %878 = sbr.rel (%p876) target = $region56
        $region55: #{tpu_custom_call.1} parent=51 // pred_region
          %s879 = sand.u32 %s98, 1
          %s880 = scalar_lea.sflag [#allocation4], %s879
          %s881 = sand.u32 %s98, 1
          %s882 = smul.addr %s881, 16
          %s883 = scalar_lea.vmem [#allocation8], %s882
          %884 = dma.done %s880, 256
        $region56: #{tpu_custom_call.1} parent=51 // pred_fallthru
          _
      $region52: #{tpu_custom_call.1} parent=5 // pred_fallthru
        _
    $region6: #{tpu_custom_call.1} parent=1 // loop_footer
      %s20 = sadd.s32 1, %s16
    $region7: #{tpu_custom_call.1} parent=1 // loop_footer_branch
      %15 = sbr.rel target = $region3
    $region8: #{tpu_custom_call.1} parent=1 // loop_exit
      _
    %885 = vsyncpa [#allocation3], 1
    %s886 = scalar_lea.sflag [#allocation3], 1
    %887 = vsyncpa %s886, 1
    %888 = vsyncpa [#allocation6], 1
    %889 = vsyncpa [#allocation4], 1
    %s890 = scalar_lea.sflag [#allocation4], 1
    %891 = vsyncpa %s890, 1

</llo_original>
